<compile_context>
chip_gen: v5e
topology: v5e:2x2
jax: 0.10.0
libtpu: 0.0.40
codegen_flags: <defaults>
</compile_context>

<pallas_src>
import functools

import jax
import jax.numpy as jnp
from jax import lax
from jax.experimental import pallas as pl
from jax.experimental.pallas import tpu as pltpu

LANE = 128          # vreg lane width
SUBLANE = 8         # vreg sublane count
NEG_BIG = -1e30     # bias for masked (padded) vocab columns -> exp() == 0


def _round_up(a, m):
    return pl.cdiv(a, m) * m


def _linear_logsoftmax_kernel(x_ref, w_ref, b_ref, o_ref,
                              logits_ref, m_ref, l_ref, *, vocab, tile_n):
    """grid = (row_tiles, phase in {0,1}, vocab_tiles).

    phase 0: logits tile = x @ W_j + b_j  (bf16 MXU, f32 acc), cache in VMEM scratch,
             update per-row running max / sum (online log-sum-exp).
    phase 1: read cached logits tile, store log-softmax = logits - m - log(l).
    """
    p = pl.program_id(1)
    j = pl.program_id(2)
    off = pl.multiple_of(j * tile_n, LANE)

    @pl.when(jnp.logical_and(p == 0, j == 0))
    def _init():
        m_ref[...] = jnp.full_like(m_ref, -jnp.inf)
        l_ref[...] = jnp.zeros_like(l_ref)

    @pl.when(p == 0)
    def _accumulate():
        logits = jnp.dot(x_ref[...], w_ref[...],
                         preferred_element_type=jnp.float32) + b_ref[...]
        # Mask columns beyond the true vocab (ragged last tile / edge-block garbage).
        col = j * tile_n + lax.broadcasted_iota(jnp.int32, logits.shape, 1)
        logits = jnp.where(col < vocab, logits, NEG_BIG)
        logits_ref[:, pl.ds(off, tile_n)] = logits

        m_prev = m_ref[...]
        m_new = jnp.maximum(m_prev, jnp.max(logits, axis=-1, keepdims=True))
        l_ref[...] = (l_ref[...] * jnp.exp(m_prev - m_new)
                      + jnp.sum(jnp.exp(logits - m_new), axis=-1, keepdims=True))
        m_ref[...] = m_new

    @pl.when(p == 1)
    def _finalize():
        logits = logits_ref[:, pl.ds(off, tile_n)]
        out = logits - m_ref[...] - jnp.log(l_ref[...])
        o_ref[...] = out.astype(o_ref.dtype)


def linear_log_softmax(x, w, b, *, row_tile=256, vocab_tile=512):
    """log_softmax(x @ w + b, axis=-1).

    x: [..., d_model]
    w: [d_model, vocab]  (PyTorch nn.Linear weight transposed: [in, out])
    b: [vocab]
    """
    d_model, vocab = w.shape
    lead_shape = x.shape[:-1]

    # bf16 into the MXU; f32 accumulation + f32 epilogue keep softmax accuracy.
    x2 = x.reshape(-1, d_model).astype(jnp.bfloat16)
    wb = w.astype(jnp.bfloat16)
    b2 = b.astype(jnp.float32).reshape(1, vocab)
    m_rows = x2.shape[0]

    # Lane-dense vocab tile (multiple of 128, no wider than the padded vocab).
    tile_n = min(vocab_tile, _round_up(vocab, LANE))
    tile_n = max(LANE, (tile_n // LANE) * LANE)
    n_tiles = pl.cdiv(vocab, tile_n)
    n_padded = n_tiles * tile_n

    # Sublane-aligned row tile; shrink so the f32 logits scratch stays <= 16 MiB
    # (leaves room for double-buffered weight/output tiles inside the 48 MiB budget).
    tm = min(row_tile, _round_up(m_rows, SUBLANE))
    tm = max(SUBLANE, (tm // SUBLANE) * SUBLANE)
    LOGITS_SCRATCH_BUDGET = 16 * 1024 * 1024
    while tm > SUBLANE and tm * n_padded * 4 > LOGITS_SCRATCH_BUDGET:
        tm = max(SUBLANE, (tm // 2 // SUBLANE) * SUBLANE)
    # Give both TensorCores work (v7x megacore) when there would be a single row tile.
    if pl.cdiv(m_rows, tm) < 2 and tm > SUBLANE:
        tm = max(SUBLANE, _round_up(pl.cdiv(m_rows, 2), SUBLANE))
    m_tiles = pl.cdiv(m_rows, tm)

    grid = (m_tiles, 2, n_tiles)

    flops = 2 * m_rows * d_model * vocab
    transcendentals = 2 * m_rows * vocab
    bytes_accessed = (m_rows * d_model * 2            # x (bf16)
                      + m_tiles * d_model * vocab * 2  # weight streamed per row tile (bf16)
                      + vocab * 4                      # bias
                      + m_rows * vocab * 4)            # output (f32)

    out = pl.pallas_call(
        functools.partial(_linear_logsoftmax_kernel, vocab=vocab, tile_n=tile_n),
        out_shape=jax.ShapeDtypeStruct((m_rows, vocab), jnp.float32),
        grid=grid,
        in_specs=[
            # Activation row tile: fetched once per row tile.
            pl.BlockSpec((tm, d_model), lambda i, p, j: (i, 0)),
            # Weight vocab tile: streamed in phase 0; pinned to block 0 in phase 1
            # so no weight re-streaming happens during the normalization sweep.
            pl.BlockSpec((d_model, tile_n), lambda i, p, j: (0, j * (1 - p))),
            pl.BlockSpec((1, tile_n), lambda i, p, j: (0, j * (1 - p))),
        ],
        # Phase 0 parks on block (i, 0) (never written, never copied out mid-phase);
        # phase 1 writes each (i, j) exactly once -> single lane-dense writeback per block.
        out_specs=pl.BlockSpec((tm, tile_n), lambda i, p, j: (i, j * p)),
        scratch_shapes=[
            pltpu.VMEM((tm, n_padded), jnp.float32),   # cached logits for the row tile
            pltpu.VMEM((tm, 1), jnp.float32),          # running max
            pltpu.VMEM((tm, 1), jnp.float32),          # running sum
        ],
        compiler_params=pltpu.CompilerParams(
            dimension_semantics=("parallel", "arbitrary", "arbitrary"),
            vmem_limit_bytes=48 * 1024 * 1024),
        cost_estimate=pl.CostEstimate(flops=flops,
                                      transcendentals=transcendentals,
                                      bytes_accessed=bytes_accessed),
    )(x2, wb, b2)

    return out.reshape(*lead_shape, vocab)


if __name__ == "__main__":
    # Small shapes consistent with the module: batch=2, seq=8, d_model=32, vocab=16.
    B, S, D_MODEL, VOCAB = 2, 8, 32, 16

    key = jax.random.PRNGKey(0)
    kx, kw, kb = jax.random.split(key, 3)
    x = jax.random.normal(kx, (B, S, D_MODEL), jnp.float32)
    w = jax.random.normal(kw, (D_MODEL, VOCAB), jnp.float32) * 0.02
    b = jax.random.normal(kb, (VOCAB,), jnp.float32) * 0.01

    fwd = jax.jit(functools.partial(linear_log_softmax, row_tile=256, vocab_tile=512))
    log_probs = jax.block_until_ready(fwd(x, w, b))

    # shape / finiteness / normalization checks
    assert log_probs.shape == (B, S, VOCAB), log_probs.shape
    assert bool(jnp.all(jnp.isfinite(log_probs)))
    prob_sums = jnp.exp(log_probs).sum(-1)
    assert bool(jnp.all(jnp.abs(prob_sums - 1.0) < 1e-4))

    # Reference with the same bf16-rounded inputs (MXU does bf16 multiply, f32 accumulate).
    xr = x.astype(jnp.bfloat16).astype(jnp.float32)
    wr = w.astype(jnp.bfloat16).astype(jnp.float32)
    ref_bf16 = jax.nn.log_softmax(jnp.einsum("bsd,dv->bsv", xr, wr) + b, axis=-1)
    assert bool(jnp.allclose(log_probs, ref_bf16, atol=1e-4, rtol=1e-4))

    # Looser check against the pure-f32 PyTorch-equivalent reference.
    ref_f32 = jax.nn.log_softmax(jnp.einsum("bsd,dv->bsv", x, w) + b, axis=-1)
    assert bool(jnp.allclose(log_probs, ref_f32, atol=3e-2, rtol=3e-2))

    print("KERNEL_OK")
</pallas_src>

<mosaic_0001>
module attributes {stable_mosaic.version = 11 : i64} {
  func.func @_linear_logsoftmax_kernel(%arg0: i32, %arg1: i32, %arg2: i32, %arg3: memref<8x32xbf16, #tpu.memory_space<vmem>>, %arg4: memref<32x128xbf16, #tpu.memory_space<vmem>>, %arg5: memref<1x128xf32, #tpu.memory_space<vmem>>, %arg6: memref<8x128xf32, #tpu.memory_space<vmem>>, %arg7: memref<8x128xf32, #tpu.memory_space<vmem>>, %arg8: memref<8x1xf32, #tpu.memory_space<vmem>>, %arg9: memref<8x1xf32, #tpu.memory_space<vmem>>) attributes {dimension_semantics = [#tpu.dimension_semantics<parallel>, #tpu.dimension_semantics<arbitrary>, #tpu.dimension_semantics<arbitrary>], iteration_bounds = array<i64: 2, 2, 1>, scalar_prefetch = 0 : i64, scratch_operands = 3 : i64, tpu.core_type = #tpu.core_type<tc>, window_params = [{transform_indices = @transform_0, window_bounds = array<i64: 8, 32>}, {transform_indices = @transform_1, window_bounds = array<i64: 32, 128>}, {transform_indices = @transform_2, window_bounds = array<i64: 1, 128>}, {transform_indices = @transform_3, window_bounds = array<i64: 8, 128>}]} {
    %c128_i32 = arith.constant 128 : i32
    %0 = arith.muli %arg2, %c128_i32 : i32
    %1 = tpu.assume_multiple %0, 128 : i32
    %c0_i32 = arith.constant 0 : i32
    %2 = arith.cmpi eq, %arg1, %c0_i32 : i32
    %c0_i32_0 = arith.constant 0 : i32
    %3 = arith.cmpi eq, %arg2, %c0_i32_0 : i32
    %4 = arith.andi %2, %3 : i1
    %5 = arith.extui %4 : i1 to i32
    %c0_i32_1 = arith.constant 0 : i32
    %6 = arith.cmpi ne, %5, %c0_i32_1 : i32
    scf.if %6 {
      %cst = arith.constant 0xFF800000 : f32
      %13 = vector.broadcast %cst : f32 to vector<8x1xf32>
      %c0 = arith.constant 0 : index
      %c0_5 = arith.constant 0 : index
      %14 = vector.load %arg8[%c0, %c0_5] : memref<8x1xf32, #tpu.memory_space<vmem>>, vector<8x1xf32>
      tpu.vector_store %arg8[%c0, %c0_5], %13 {strides = array<i32>} : memref<8x1xf32, #tpu.memory_space<vmem>>, vector<8x1xf32>,
      %cst_6 = arith.constant 0.000000e+00 : f32
      %15 = vector.broadcast %cst_6 : f32 to vector<8x1xf32>
      %c0_7 = arith.constant 0 : index
      %c0_8 = arith.constant 0 : index
      %16 = vector.load %arg9[%c0_7, %c0_8] : memref<8x1xf32, #tpu.memory_space<vmem>>, vector<8x1xf32>
      tpu.vector_store %arg9[%c0_7, %c0_8], %15 {strides = array<i32>} : memref<8x1xf32, #tpu.memory_space<vmem>>, vector<8x1xf32>,
    } else {
    }
    %c0_i32_2 = arith.constant 0 : i32
    %7 = arith.cmpi eq, %arg1, %c0_i32_2 : i32
    %8 = arith.extui %7 : i1 to i32
    %c0_i32_3 = arith.constant 0 : i32
    %9 = arith.cmpi ne, %8, %c0_i32_3 : i32
    scf.if %9 {
      %c0 = arith.constant 0 : index
      %c0_5 = arith.constant 0 : index
      %13 = vector.load %arg3[%c0, %c0_5] : memref<8x32xbf16, #tpu.memory_space<vmem>>, vector<8x32xbf16>
      %c0_6 = arith.constant 0 : index
      %c0_7 = arith.constant 0 : index
      %14 = vector.load %arg4[%c0_6, %c0_7] : memref<32x128xbf16, #tpu.memory_space<vmem>>, vector<32x128xbf16>
      %cst = arith.constant dense<0.000000e+00> : vector<8x128xf32>
      %15 = tpu.matmul %13, %14, %cst {dimension_numbers = #tpu.dot_dimension_numbers<[1], [0], [0], [1], [0, 0, 1, 1], [], []>} : vector<8x32xbf16>, vector<32x128xbf16>, vector<8x128xf32> -> vector<8x128xf32>
      %c0_8 = arith.constant 0 : index
      %c0_9 = arith.constant 0 : index
      %16 = vector.load %arg5[%c0_8, %c0_9] : memref<1x128xf32, #tpu.memory_space<vmem>>, vector<1x128xf32>
      %17 = vector.broadcast %16 : vector<1x128xf32> to vector<8x128xf32>
      %18 = arith.addf %15, %17 : vector<8x128xf32>
      %c128_i32_10 = arith.constant 128 : i32
      %19 = arith.muli %arg2, %c128_i32_10 : i32
      %20 = tpu.iota {dimensions = array<i32: 1>} : vector<8x128xi32>
      %21 = vector.broadcast %19 : i32 to vector<8x128xi32>
      %22 = arith.addi %21, %20 : vector<8x128xi32>
      %c16_i32 = arith.constant 16 : i32
      %23 = vector.broadcast %c16_i32 : i32 to vector<8x128xi32>
      %24 = arith.cmpi slt, %22, %23 : vector<8x128xi32>
      %cst_11 = arith.constant -1.000000e+30 : f32
      %25 = vector.broadcast %cst_11 : f32 to vector<8x128xf32>
      %26 = arith.select %24, %18, %25 : vector<8x128xi1>, vector<8x128xf32>
      %c0_12 = arith.constant 0 : index
      %27 = arith.index_cast %1 : i32 to index
      %28 = vector.load %arg7[%c0_12, %27] : memref<8x128xf32, #tpu.memory_space<vmem>>, vector<8x128xf32>
      tpu.vector_store %arg7[%c0_12, %27], %26 {strides = array<i32>} : memref<8x128xf32, #tpu.memory_space<vmem>>, vector<8x128xf32>,
      %c0_13 = arith.constant 0 : index
      %c0_14 = arith.constant 0 : index
      %29 = vector.load %arg8[%c0_13, %c0_14] : memref<8x1xf32, #tpu.memory_space<vmem>>, vector<8x1xf32>
      %cst_15 = arith.constant dense<0xFF800000> : vector<8xf32>
      %30 = vector.multi_reduction <maximumf>, %26, %cst_15 [1] : vector<8x128xf32> to vector<8xf32>
      %31 = vector.shape_cast %30 : vector<8xf32> to vector<8x1xf32>
      %32 = arith.maximumf %29, %31 : vector<8x1xf32>
      %c0_16 = arith.constant 0 : index
      %c0_17 = arith.constant 0 : index
      %33 = vector.load %arg9[%c0_16, %c0_17] : memref<8x1xf32, #tpu.memory_space<vmem>>, vector<8x1xf32>
      %34 = arith.subf %29, %32 : vector<8x1xf32>
      %35 = math.exp %34 : vector<8x1xf32>
      %36 = arith.mulf %33, %35 : vector<8x1xf32>
      %37 = vector.broadcast %32 : vector<8x1xf32> to vector<8x128xf32>
      %38 = arith.subf %26, %37 : vector<8x128xf32>
      %39 = math.exp %38 : vector<8x128xf32>
      %cst_18 = arith.constant dense<0.000000e+00> : vector<8xf32>
      %40 = vector.multi_reduction <add>, %39, %cst_18 [1] : vector<8x128xf32> to vector<8xf32>
      %41 = vector.shape_cast %40 : vector<8xf32> to vector<8x1xf32>
      %42 = arith.addf %36, %41 : vector<8x1xf32>
      %c0_19 = arith.constant 0 : index
      %c0_20 = arith.constant 0 : index
      %43 = vector.load %arg9[%c0_19, %c0_20] : memref<8x1xf32, #tpu.memory_space<vmem>>, vector<8x1xf32>
      tpu.vector_store %arg9[%c0_19, %c0_20], %42 {strides = array<i32>} : memref<8x1xf32, #tpu.memory_space<vmem>>, vector<8x1xf32>,
      %c0_21 = arith.constant 0 : index
      %c0_22 = arith.constant 0 : index
      %44 = vector.load %arg8[%c0_21, %c0_22] : memref<8x1xf32, #tpu.memory_space<vmem>>, vector<8x1xf32>
      tpu.vector_store %arg8[%c0_21, %c0_22], %32 {strides = array<i32>} : memref<8x1xf32, #tpu.memory_space<vmem>>, vector<8x1xf32>,
    } else {
    }
    %c1_i32 = arith.constant 1 : i32
    %10 = arith.cmpi eq, %arg1, %c1_i32 : i32
    %11 = arith.extui %10 : i1 to i32
    %c0_i32_4 = arith.constant 0 : i32
    %12 = arith.cmpi ne, %11, %c0_i32_4 : i32
    scf.if %12 {
      %c0 = arith.constant 0 : index
      %13 = arith.index_cast %1 : i32 to index
      %14 = vector.load %arg7[%c0, %13] : memref<8x128xf32, #tpu.memory_space<vmem>>, vector<8x128xf32>
      %c0_5 = arith.constant 0 : index
      %c0_6 = arith.constant 0 : index
      %15 = vector.load %arg8[%c0_5, %c0_6] : memref<8x1xf32, #tpu.memory_space<vmem>>, vector<8x1xf32>
      %16 = vector.broadcast %15 : vector<8x1xf32> to vector<8x128xf32>
      %17 = arith.subf %14, %16 : vector<8x128xf32>
      %c0_7 = arith.constant 0 : index
      %c0_8 = arith.constant 0 : index
      %18 = vector.load %arg9[%c0_7, %c0_8] : memref<8x1xf32, #tpu.memory_space<vmem>>, vector<8x1xf32>
      %19 = math.log %18 : vector<8x1xf32>
      %20 = vector.broadcast %19 : vector<8x1xf32> to vector<8x128xf32>
      %21 = arith.subf %17, %20 : vector<8x128xf32>
      %c0_9 = arith.constant 0 : index
      %c0_10 = arith.constant 0 : index
      %22 = vector.load %arg6[%c0_9, %c0_10] : memref<8x128xf32, #tpu.memory_space<vmem>>, vector<8x128xf32>
      tpu.vector_store %arg6[%c0_9, %c0_10], %21 {strides = array<i32>} : memref<8x128xf32, #tpu.memory_space<vmem>>, vector<8x128xf32>,
    } else {
    }
    return
  }
  func.func @transform_0(%arg0: i32, %arg1: i32, %arg2: i32) -> (i32, i32) {
    %c0_i32 = arith.constant 0 : i32
    %c0_i32_0 = arith.constant 0 : i32
    return %arg0, %c0_i32 : i32, i32
  }
  func.func @transform_1(%arg0: i32, %arg1: i32, %arg2: i32) -> (i32, i32) {
    %c1_i32 = arith.constant 1 : i32
    %0 = arith.subi %c1_i32, %arg1 : i32
    %1 = arith.muli %arg2, %0 : i32
    %c0_i32 = arith.constant 0 : i32
    %c0_i32_0 = arith.constant 0 : i32
    return %c0_i32, %1 : i32, i32
  }
  func.func @transform_2(%arg0: i32, %arg1: i32, %arg2: i32) -> (i32, i32) {
    %c1_i32 = arith.constant 1 : i32
    %0 = arith.subi %c1_i32, %arg1 : i32
    %1 = arith.muli %arg2, %0 : i32
    %c0_i32 = arith.constant 0 : i32
    %c0_i32_0 = arith.constant 0 : i32
    return %c0_i32, %1 : i32, i32
  }
  func.func @transform_3(%arg0: i32, %arg1: i32, %arg2: i32) -> (i32, i32) {
    %0 = arith.muli %arg2, %arg1 : i32
    %c0_i32 = arith.constant 0 : i32
    return %arg0, %0 : i32, i32
  }
}

</mosaic_0001>

<llo_original>
// kernel: linear_log_softmax.1
$region0: #{linear_log_softmax.1}
  #allocation0 [shape = 'u32[]', space=smem, size = 0x4, offset = 0x4, fixed_abs, tag = 'smem constant byte address 0x4 - core index']
  #allocation1 [shape = 'u32[72,128]{1,0:T(1,128)}', space=vmem, size = 0x9000, scoped, tag = 'internal scratch']
  #allocation2 [shape = 'f32[8,128]{1,0:T(8,128)}', space=vmem, size = 0x1000, scoped, tag = 'scratch operand']
  #allocation3 [shape = 'f32[8,1]{1,0:T(8,128)}', space=vmem, size = 0x1000, scoped, tag = 'scratch operand']
  #allocation4 [shape = 'f32[8,1]{1,0:T(8,128)}', space=vmem, size = 0x1000, scoped, tag = 'scratch operand']
  %s0 = inlined_call_operand.vmem [shape: bf16[16,32], index: 0, kind: input, shape index: {}]
  %s1 = inlined_call_operand.vmem [shape: bf16[32,16], index: 1, kind: input, shape index: {}]
  %s2 = inlined_call_operand.vmem [shape: f32[1,16], index: 2, kind: input, shape index: {}]
  %s3 = inlined_call_operand.hbm [shape: f32[16,16], index: 3, kind: output, shape index: {}]
  %s4 = sld [smem:[#allocation0]]
  $region57: #{linear_log_softmax.1} parent=0
    _
  %s6 = ssub.s32 1, %s4
  %s7 = scalar_select 0, %s6, %s4
  $region1: #{linear_log_softmax.1} parent=0
    #allocation5 [shape = 'u8[8192]{0}', space=vmem, size = 0x2000, scoped, tag = 'output window, operand 0']
    #allocation6 [shape = 's32[2]{0}', space=sflag, size = 0x8, scoped, tag = 'scoped memory for linear_log_softmax.1']
    %8 = vsyncpa [#allocation6], 0
    %s9 = scalar_lea.sflag [#allocation6], 1
    %10 = vsyncpa %s9, 0
    loop: start=0, step=1, limit=6
    $region2: #{linear_log_softmax.1} parent=1 // loop_pre_header
      _
    $region3: #{linear_log_softmax.1} parent=1 // loop_header
      %s12 = sphi 0, %s16
      %p13 = scmp.ge.s32.totalorder %s12, 6
      %s19 = sphi 0, %s38
      %s20 = sphi 0, %s34
      %s21 = sphi 0, %s30
      %s22 = sphi 0, %s19
      %s23 = sphi 0, %s20
      %s24 = sphi 0, %s21
      %s25 = sphi 0, %s22
      %s26 = sphi 0, %s23
      %s27 = sphi 0, %s24
      %s41 = sphi 0, %s43
      %s44 = sphi 0, %s41
      %s45 = sphi 0, %s44
      %s61 = sphi 0, %s45
      %s71 = sphi 0, %s73
      %s74 = sphi 0, %s71
      %s75 = sphi 0, %s74
      %s91 = sphi 0, %s75
      %s101 = sphi 0, %s103
      %s104 = sphi 0, %s101
      %s105 = sphi 0, %s104
      %s121 = sphi 0, %s105
      %s131 = sphi 0, %s133
      %s134 = sphi 0, %s131
      %s135 = sphi 0, %s134
      %s151 = sphi 0, %s135
    $region4: #{linear_log_softmax.1} parent=1 // loop_header_branch
      %15 = sbr.rel (%p13) target = $region8
    $region5: #{linear_log_softmax.1} parent=1 // loop_body
      %s17 = ssub.s32 %s12, 1
      %s18 = ssub.s32 %s12, 2
      %s28 = sadd.s32 1, %s21
      %p29 = scmp.ge.s32.totalorder %s28, 1
      %s30 = scalar_select %p29, 0, %s28
      %s31 = sadd.s32 1, %s20
      %s32 = scalar_select %p29, %s31, %s20
      %p33 = scmp.ge.s32.totalorder %s32, 2
      %s34 = scalar_select %p33, 0, %s32
      %s35 = sadd.s32 1, %s19
      %s36 = scalar_select %p33, %s35, %s19
      %p37 = scmp.ge.s32.totalorder %s36, 2
      %s38 = scalar_select %p37, 0, %s36
      %s39 = ssub.s32 %s19, %s38
      %p40 = scmp.eq.s32.totalorder %s39, 0
      %s42 = sadd.s32 %s41, 1
      %s43 = scalar_select %p40, %s41, %s42
      %p46 = pneg %p40
      %p47 = scmp.eq.s32.totalorder %s12, 3
      %p48 = por %p46, %p47
      %p49 = scmp.ne.s32.totalorder %s41, %s44
      %p50 = scmp.eq.s32.totalorder %s12, 0
      %p51 = por %p49, %p50
      %p52 = scmp.ne.s32.totalorder %s41, %s44
      %p53 = scmp.eq.s32.totalorder %s17, 3
      %p54 = por %p52, %p53
      %p55 = scmp.ne.s32.totalorder %s44, %s45
      %p56 = scmp.eq.s32.totalorder %s17, 0
      %p57 = por %p55, %p56
      %p58 = scmp.ne.s32.totalorder %s44, %s45
      %p59 = scmp.eq.s32.totalorder %s18, 3
      %p60 = por %p58, %p59
      %p62 = scmp.ne.s32.totalorder %s45, %s61
      %p63 = scmp.eq.s32.totalorder %s18, 0
      %p64 = por %p62, %p63
      %s65 = ssub.s32 1, %s20
      %s66 = smul.u32 %s21, %s65
      %s67 = ssub.s32 1, %s34
      %s68 = smul.u32 %s30, %s67
      %s69 = ssub.s32 %s66, %s68
      %p70 = scmp.eq.s32.totalorder %s69, 0
      %s72 = sadd.s32 %s71, 1
      %s73 = scalar_select %p70, %s71, %s72
      %p76 = pneg %p70
      %p77 = scmp.eq.s32.totalorder %s12, 3
      %p78 = por %p76, %p77
      %p79 = scmp.ne.s32.totalorder %s71, %s74
      %p80 = scmp.eq.s32.totalorder %s12, 0
      %p81 = por %p79, %p80
      %p82 = scmp.ne.s32.totalorder %s71, %s74
      %p83 = scmp.eq.s32.totalorder %s17, 3
      %p84 = por %p82, %p83
      %p85 = scmp.ne.s32.totalorder %s74, %s75
      %p86 = scmp.eq.s32.totalorder %s17, 0
      %p87 = por %p85, %p86
      %p88 = scmp.ne.s32.totalorder %s74, %s75
      %p89 = scmp.eq.s32.totalorder %s18, 3
      %p90 = por %p88, %p89
      %p92 = scmp.ne.s32.totalorder %s75, %s91
      %p93 = scmp.eq.s32.totalorder %s18, 0
      %p94 = por %p92, %p93
      %s95 = ssub.s32 1, %s20
      %s96 = smul.u32 %s21, %s95
      %s97 = ssub.s32 1, %s34
      %s98 = smul.u32 %s30, %s97
      %s99 = ssub.s32 %s96, %s98
      %p100 = scmp.eq.s32.totalorder %s99, 0
      %s102 = sadd.s32 %s101, 1
      %s103 = scalar_select %p100, %s101, %s102
      %p106 = pneg %p100
      %p107 = scmp.eq.s32.totalorder %s12, 3
      %p108 = por %p106, %p107
      %p109 = scmp.ne.s32.totalorder %s101, %s104
      %p110 = scmp.eq.s32.totalorder %s12, 0
      %p111 = por %p109, %p110
      %p112 = scmp.ne.s32.totalorder %s101, %s104
      %p113 = scmp.eq.s32.totalorder %s17, 3
      %p114 = por %p112, %p113
      %p115 = scmp.ne.s32.totalorder %s104, %s105
      %p116 = scmp.eq.s32.totalorder %s17, 0
      %p117 = por %p115, %p116
      %p118 = scmp.ne.s32.totalorder %s104, %s105
      %p119 = scmp.eq.s32.totalorder %s18, 3
      %p120 = por %p118, %p119
      %p122 = scmp.ne.s32.totalorder %s105, %s121
      %p123 = scmp.eq.s32.totalorder %s18, 0
      %p124 = por %p122, %p123
      %s125 = smul.u32 %s21, %s20
      %s126 = smul.u32 %s30, %s34
      %s127 = ssub.s32 %s19, %s38
      %s128 = ssub.s32 %s125, %s126
      %s129 = sor.u32 %s127, %s128
      %p130 = scmp.eq.s32.totalorder %s129, 0
      %s132 = sadd.s32 %s131, 1
      %s133 = scalar_select %p130, %s131, %s132
      %p136 = pneg %p130
      %p137 = scmp.eq.s32.totalorder %s12, 3
      %p138 = por %p136, %p137
      %p139 = scmp.ne.s32.totalorder %s131, %s134
      %p140 = scmp.eq.s32.totalorder %s12, 0
      %p141 = por %p139, %p140
      %p142 = scmp.ne.s32.totalorder %s131, %s134
      %p143 = scmp.eq.s32.totalorder %s17, 3
      %p144 = por %p142, %p143
      %p145 = scmp.ne.s32.totalorder %s134, %s135
      %p146 = scmp.eq.s32.totalorder %s17, 0
      %p147 = por %p145, %p146
      %p148 = scmp.ne.s32.totalorder %s134, %s135
      %p149 = scmp.eq.s32.totalorder %s18, 3
      %p150 = por %p148, %p149
      %p152 = scmp.ne.s32.totalorder %s135, %s151
      %p153 = scmp.eq.s32.totalorder %s18, 0
      %p154 = por %p152, %p153
      %p155 = scmp.le.s32.totalorder 1, %s12
      %p156 = scmp.lt.s32.totalorder %s12, 5
      %p157 = pnand %p155, %p156
      %p158 = pneg %p157
      // Predicated region
      $region9: #{linear_log_softmax.1} parent=5 // pred_check
        _
      $region10: #{linear_log_softmax.1} parent=5 // pred_check_branch
        %160 = sbr.rel (%p157) target = $region12
      $region11: #{linear_log_softmax.1} parent=5 // pred_region
        %s161 = ssub.s32 %s12, 1
      $region12: #{linear_log_softmax.1} parent=5 // pred_fallthru
        _
      %p162 = scmp.lt.s32.totalorder %s12, 4
      // Predicated region
      $region13: #{linear_log_softmax.1} parent=5 // pred_check
        %p163 = pneg %p162
      $region14: #{linear_log_softmax.1} parent=5 // pred_check_branch
        %165 = sbr.rel (%p163) target = $region16
      $region15: #{linear_log_softmax.1} parent=5 // pred_region
        // Predicated region
        $region17: #{linear_log_softmax.1} parent=15 // pred_check
          %p166 = pneg %p51
        $region18: #{linear_log_softmax.1} parent=15 // pred_check_branch
          %168 = sbr.rel (%p166) target = $region20
        $region19: #{linear_log_softmax.1} parent=15 // pred_region
          %p169 = scmp.lt.s32.totalorder %s19, 1
          %s170 = scalar_select %p169, %s19, 1
          %s171 = smul.addr %s170, 4
          %s172 = scalar_lea.vmem %s0, %s171
        $region20: #{linear_log_softmax.1} parent=15 // pred_fallthru
          _
        // Predicated region
        $region21: #{linear_log_softmax.1} parent=15 // pred_check
          %p173 = pneg %p81
        $region22: #{linear_log_softmax.1} parent=15 // pred_check_branch
          %175 = sbr.rel (%p173) target = $region24
        $region23: #{linear_log_softmax.1} parent=15 // pred_region
          %s176 = ssub.s32 1, %s20
          %s177 = smul.u32 %s21, %s176
          %p178 = scmp.lt.s32.totalorder %s177, 0
          %s179 = scalar_select %p178, %s177, 0
          %s180 = smul.addr %s179, 4
          %s181 = scalar_lea.vmem %s1, %s180
          %s182 = ssub.s32 1, %s20
          %s183 = smul.u32 %s21, %s182
        $region24: #{linear_log_softmax.1} parent=15 // pred_fallthru
          _
        // Predicated region
        $region25: #{linear_log_softmax.1} parent=15 // pred_check
          %p184 = pneg %p111
        $region26: #{linear_log_softmax.1} parent=15 // pred_check_branch
          %186 = sbr.rel (%p184) target = $region28
        $region27: #{linear_log_softmax.1} parent=15 // pred_region
          %s187 = ssub.s32 1, %s20
          %s188 = smul.u32 %s21, %s187
          %p189 = scmp.lt.s32.totalorder %s188, 0
          %s190 = scalar_select %p189, %s188, 0
          %s191 = scalar_lea.vmem %s2, %s190
          %s192 = ssub.s32 1, %s20
          %s193 = smul.u32 %s21, %s192
        $region28: #{linear_log_softmax.1} parent=15 // pred_fallthru
          _
      $region16: #{linear_log_softmax.1} parent=5 // pred_fallthru
        _
      %p194 = scmp.le.s32.totalorder 1, %s12
      %p195 = scmp.lt.s32.totalorder %s12, 5
      %p196 = pnand %p194, %p195
      %p197 = pneg %p196
      // Predicated region
      $region29: #{linear_log_softmax.1} parent=5 // pred_check
        _
      $region30: #{linear_log_softmax.1} parent=5 // pred_check_branch
        %199 = sbr.rel (%p196) target = $region32
      $region31: #{linear_log_softmax.1} parent=5 // pred_region
        %s200 = ssub.s32 %s12, 1
        %p201 = scmp.lt.s32.totalorder %s22, 1
        %s202 = scalar_select %p201, %s22, 1
        %s203 = smul.addr %s202, 4
        %s204 = scalar_lea.vmem %s0, %s203
        %p205 = pneg %p57
        %p206 = pneg %p54
        %s207 = ssub.s32 1, %s23
        %s208 = smul.u32 %s24, %s207
        %p209 = scmp.lt.s32.totalorder %s208, 0
        %s210 = scalar_select %p209, %s208, 0
        %s211 = smul.addr %s210, 4
        %s212 = scalar_lea.vmem %s1, %s211
        %p213 = pneg %p87
        %p214 = pneg %p84
        %s215 = ssub.s32 1, %s23
        %s216 = smul.u32 %s24, %s215
        %p217 = scmp.lt.s32.totalorder %s216, 0
        %s218 = scalar_select %p217, %s216, 0
        %s219 = scalar_lea.vmem %s2, %s218
        %p220 = pneg %p117
        %p221 = pneg %p114
        %p222 = pneg %p147
        %p223 = pneg %p144
        %s224 = sand.u32 %s134, 1
        %s225 = scalar_lea.sflag [#allocation6], %s224
        %s226 = sand.u32 %s134, 1
        %s227 = smul.addr %s226, 8
        %s228 = scalar_lea.vmem [#allocation5], %s227
        %p229 = scmp.lt.s32.totalorder %s22, 1
        %s230 = scalar_select %p229, %s22, 1
        %s231 = smul.addr %s230, 4
        %s232 = scalar_lea.vmem %s0, %s231
        %s233 = ssub.s32 1, %s23
        %s234 = smul.u32 %s24, %s233
        %p235 = scmp.lt.s32.totalorder %s234, 0
        %s236 = scalar_select %p235, %s234, 0
        %s237 = smul.addr %s236, 4
        %s238 = scalar_lea.vmem %s1, %s237
        %s239 = ssub.s32 1, %s23
        %s240 = smul.u32 %s24, %s239
        %s241 = ssub.s32 1, %s23
        %s242 = smul.u32 %s24, %s241
        %p243 = scmp.lt.s32.totalorder %s242, 0
        %s244 = scalar_select %p243, %s242, 0
        %s245 = scalar_lea.vmem %s2, %s244
        %s246 = ssub.s32 1, %s23
        %s247 = smul.u32 %s24, %s246
        %s248 = smul.u32 %s24, %s23
        %s250 = smul.u32 %s24, 128
        %p251 = scmp.eq.s32.totalorder %s23, 0
        %p252 = scmp.eq.s32.totalorder %s24, 0
        %p253 = pnand %p251, %p252
        %p254 = pneg %p253
        // Predicated region
        $region33: #{linear_log_softmax.1} parent=31 // pred_check
          _
        $region34: #{linear_log_softmax.1} parent=31 // pred_check_branch
          %256 = sbr.rel (%p253) target = $region36
        $region35: #{linear_log_softmax.1} parent=31 // pred_region
          %vm257 = vcmask 7168
          %258 = vst.msk [vmem:[#allocation3] sm:$0xff] %vm257, -inf
          %259 = vst.msk [vmem:[#allocation4] sm:$0xff] %vm257, 0.0
        $region36: #{linear_log_softmax.1} parent=31 // pred_fallthru
          _
        // Predicated region
        $region37: #{linear_log_softmax.1} parent=31 // pred_check
          %p260 = pneg %p251
        $region38: #{linear_log_softmax.1} parent=31 // pred_check_branch
          %262 = sbr.rel (%p260) target = $region40
        $region39: #{linear_log_softmax.1} parent=31 // pred_region
          %v263 = vld [vmem:[%s232] sm:$0xf]
          %v264 = vld [vmem:[%s238] sm:$0xf]
          %v265 = vld [vmem:[%s238 + $0x4] sm:$0xf]
          %v266 = vld [vmem:[%s238 + $0x8] sm:$0xf]
          %v267 = vld [vmem:[%s238 + $0xc] sm:$0xf]
          %v268 = vld [vmem:[%s245] sm:$0x1]
          %v270 = vperm.slane %v268, 0
          %v276 = vunpack.c.l.b16 %v264
          %v277 = vunpack.c.l.b16 %v265
          %v278 = vunpack.c.l.b16 %v266
          %v279 = vunpack.c.l.b16 %v267
          %v280 = vpack.c.b16 %v277, %v276
          %v281 = vpack.c.b16 %v279, %v278
          %vm284 = vcmask 261120
          %v286 = vsel %vm284, %v263, 0
          %288 = vmatpush.bf16.msra.mxu0 0
          %289 = vmatpush.bf16.msra.mxu0 0
          %290 = vmatpush.bf16.msra.mxu0 0
          %291 = vmatpush.bf16.msra.mxu0 0
          %292 = vmatpush.bf16.msra.mxu0 0
          %293 = vmatpush.bf16.msra.mxu0 0
          %294 = vmatpush.bf16.msra.mxu0 %v281
          %295 = vmatpush.bf16.msra.mxu0 %v280
          %296 = vmatmul.bf16.gmra.mxu0 %v286
          %v297 = vpop.f32.mrf.mxu0
          %v298 = vadd.f32 %v270, %v297
          %v299 = vpop.f32.mrf.mxu0
          %300 = vdwg.mxu0
          %v301 = vlaneseq
          %v302 = vand.u32 %v301, 127
          %v303 = vstv %s250
          %v304 = vadd.s32 %v303, %v302
          %vm305 = vcmp.lt.s32.totalorder %v304, 16
          %v306 = vsel %vm305, %v298, -1e+30
          %s307 = sshra.s32 %s250, 7
          %s308 = sand.u32 %s250, 127
          %s309 = scalar_lea.vmem [#allocation2], %s307
          %310 = vst [vmem:[%s309] sm:$0xff] %v306
          %v311 = vld [vmem:[#allocation3] sm:$0xff]
          %312 = vmax.xlane.f32.xlu0 %v306
          %v313 = vpop.xlane.xlu0 %312
          %v314 = vmax.f32 %v311, %v313
          %v315 = vld [vmem:[#allocation4] sm:$0xff]
          %v316 = vsub.f32 %v311, %v314
          %v317 = vmul.f32 %v316, 1.442695
          %v318 = vpow.pop %v317
          %v319 = vmul.f32 %v315, %v318
          %321 = vset.pattern.permute.xlu0 0
          %322 = vperm.xlu0 %321, %v314
          %v323 = vpop.permute.xlu0 %322
          %v325 = vsub.f32 %v306, %v323
          %v326 = vmul.f32 %v325, 1.442695
          %v327 = vpow.pop %v326
          %328 = vadd.xlane.f32.xlu0 %v327
          %v329 = vpop.xlane.xlu0 %328
          %v330 = vadd.f32 %v319, %v329
          %vm331 = vcmask 7168
          %332 = vst.msk [vmem:[#allocation4] sm:$0xff] %vm331, %v330
          %333 = vst.msk [vmem:[#allocation3] sm:$0xff] %vm331, %v314
        $region40: #{linear_log_softmax.1} parent=31 // pred_fallthru
          _
        %p334 = scmp.eq.s32.totalorder %s23, 1
        // Predicated region
        $region41: #{linear_log_softmax.1} parent=31 // pred_check
          %p335 = pneg %p334
        $region42: #{linear_log_softmax.1} parent=31 // pred_check_branch
          %337 = sbr.rel (%p335) target = $region44
        $region43: #{linear_log_softmax.1} parent=31 // pred_region
          %s338 = sshra.s32 %s250, 7
          %s339 = sand.u32 %s250, 127
          %s340 = scalar_lea.vmem [#allocation2], %s338
          %v341 = vld [vmem:[%s340] sm:$0xff]
          %v342 = vld [vmem:[#allocation3] sm:$0xff]
          %344 = vset.pattern.permute.xlu0 0
          %345 = vperm.xlu0 %344, %v342
          %v346 = vpop.permute.xlu0 %345
          %v348 = vsub.f32 %v341, %v346
          %v349 = vld [vmem:[#allocation4] sm:$0xff]
          %v350 = vlog2.pop %v349
          %v351 = vmul.f32 %v350, 0.6931472
          %353 = vset.pattern.permute.xlu0 0
          %354 = vperm.xlu0 %353, %v351
          %v355 = vpop.permute.xlu0 %354
          %v357 = vsub.f32 %v348, %v355
          %358 = vst [vmem:[%s228] sm:$0xff] %v357
        $region44: #{linear_log_softmax.1} parent=31 // pred_fallthru
          _
        %s359 = sand.u32 %s134, 1
        %s360 = scalar_lea.sflag [#allocation6], %s359
        %s361 = sand.u32 %s134, 1
        %s362 = smul.addr %s361, 8
        %s363 = scalar_lea.vmem [#allocation5], %s362
        // Predicated region
        $region45: #{linear_log_softmax.1} parent=31 // pred_check
          %p364 = pneg %p144
        $region46: #{linear_log_softmax.1} parent=31 // pred_check_branch
          %366 = sbr.rel (%p364) target = $region48
        $region47: #{linear_log_softmax.1} parent=31 // pred_region
          %s367 = smul.u32 %s24, %s23
          %369 = vsyncadd %s360, 0
          %s370 = sadd.s32 %s367, %s22
          %s371 = smul.addr %s370, 8
          %s372 = scalar_lea.hbm %s3, %s371
          %s374 = sshll.u32 %s363, 4
          %s375 = int_to_ptr.vmem [resolvable:$true] %s374
          %s376 = sshll.u32 %s372, 4
          %s377 = int_to_ptr.hbm [resolvable:$true] %s376
          %379 = dma.vmem_to_hbm [thread:$0]  %s375, 128, %s377, %s360
        $region48: #{linear_log_softmax.1} parent=31 // pred_fallthru
          _
      $region32: #{linear_log_softmax.1} parent=5 // pred_fallthru
        _
      %p380 = scmp.le.s32.totalorder 2, %s12
      // Predicated region
      $region49: #{linear_log_softmax.1} parent=5 // pred_check
        %p381 = pneg %p380
      $region50: #{linear_log_softmax.1} parent=5 // pred_check_branch
        %383 = sbr.rel (%p381) target = $region52
      $region51: #{linear_log_softmax.1} parent=5 // pred_region
        %s384 = ssub.s32 %s12, 2
        // Predicated region
        $region53: #{linear_log_softmax.1} parent=51 // pred_check
          %p385 = pneg %p150
        $region54: #{linear_log_softmax.1} parent=51 // pred_check_branch
          %387 = sbr.rel (%p385) target = $region56
        $region55: #{linear_log_softmax.1} parent=51 // pred_region
          %s388 = sand.u32 %s135, 1
          %s389 = scalar_lea.sflag [#allocation6], %s388
          %s390 = sand.u32 %s135, 1
          %s391 = smul.addr %s390, 8
          %s392 = scalar_lea.vmem [#allocation5], %s391
          %394 = dma.done %s389, 128
        $region56: #{linear_log_softmax.1} parent=51 // pred_fallthru
          _
      $region52: #{linear_log_softmax.1} parent=5 // pred_fallthru
        _
    $region6: #{linear_log_softmax.1} parent=1 // loop_footer
      %s16 = sadd.s32 1, %s12
    $region7: #{linear_log_softmax.1} parent=1 // loop_footer_branch
      %11 = sbr.rel target = $region3
    $region8: #{linear_log_softmax.1} parent=1 // loop_exit
      _
    %395 = vsyncpa [#allocation6], 1
    %s396 = scalar_lea.sflag [#allocation6], 1
    %397 = vsyncpa %s396, 1

</llo_original>
